<compile_context>
chip_gen: v7x
topology: tpu7x:2x2x1
jax: 0.10.0
libtpu: 0.0.40
codegen_flags: <defaults>
</compile_context>

<pallas_src>
import functools
import math

import jax
import jax.numpy as jnp
from jax import lax
from jax.experimental import pallas as pl
from jax.experimental.pallas import tpu as pltpu


def _round_up(v: int, m: int) -> int:
    return -(-v // m) * m


def _pick_tile(extent: int, pref: int, align: int) -> int:
    """Largest tile (multiple of `align`, <= padded extent, ~<= pref) whose
    padding waste round_up(extent, tile) - extent stays bounded."""
    extent = _round_up(extent, align)
    t = min(pref, extent)
    t = max(align, (t // align) * align)
    slack = max(align - 1, extent // 8)
    while t > align and _round_up(extent, t) > extent + slack:
        t = max(align, ((t // 2) // align) * align)
    return t


# --------------------------------------------------------------------------
# Kernels
# --------------------------------------------------------------------------
def _resident_kernel(x_ref, w_ref, b_ref, o_ref, *, wmul):
    """Fast path: whole (Kp, Np) weight resident in VMEM, single K step."""
    acc = jnp.dot(x_ref[...], w_ref[...], preferred_element_type=jnp.float32)
    o_ref[...] = (acc * wmul + b_ref[...]).astype(o_ref.dtype)


def _tiled_kernel(x_ref, w_ref, b_ref, o_ref, acc_ref, *, wmul):
    """General path: (M, N, K) grid, K innermost reduction, f32 accumulator."""
    k = pl.program_id(2)
    part = jnp.dot(x_ref[...], w_ref[...], preferred_element_type=jnp.float32)

    @pl.when(k == 0)
    def _first():
        acc_ref[...] = part          # no zero-fill + RMW on the first step

    @pl.when(k > 0)
    def _accum():
        acc_ref[...] += part

    @pl.when(k == pl.num_programs(2) - 1)
    def _finalize():
        o_ref[...] = (acc_ref[...] * wmul + b_ref[...]).astype(o_ref.dtype)


# --------------------------------------------------------------------------
# Wrapper
# --------------------------------------------------------------------------
def equalized_linear(
    x,
    weight,                      # PyTorch layout: (out_features, in_features)
    bias,                        # (out_features,)
    *,
    lrmul: float = 1.0,
    gain: float = math.sqrt(2.0),
    compute_dtype=jnp.bfloat16,  # bf16 by default; pass jnp.float32 for exact mode
    tm: int = 512,               # tile-size preferences (adapted per problem)
    tn: int = 256,
    tk: int = 512,
    vmem_budget_bytes: int = 12 * 1024 * 1024,  # safe on v5e/v6e/v7x scoped defaults
):
    """y = x @ (weight * wmul).T + bias * bmul  (PyTorch EqualizedLinear)."""
    orig_dtype = x.dtype
    lead_shape = x.shape[:-1]
    in_features = x.shape[-1]
    out_features, in_features_w = weight.shape
    assert in_features == in_features_w, (
        f"feature mismatch: x has {in_features}, weight expects {in_features_w}")

    # Static hyper-params + static shape -> Python floats baked into the kernel.
    wmul = float(gain) * float(in_features) ** -0.5 * float(lrmul)
    bmul = float(lrmul)

    cdt = jnp.dtype(orig_dtype if compute_dtype is None else compute_dtype)
    cbytes = cdt.itemsize
    obytes = jnp.dtype(orig_dtype).itemsize
    align_m = 8 if cbytes >= 4 else 16   # sublane packing: 8 rows f32, 16 rows bf16

    x2 = x.reshape(-1, in_features)
    M, K, N = x2.shape[0], in_features, out_features
    Mp_min = _round_up(M, align_m)
    Kp = _round_up(K, 128)
    Np = _round_up(N, 128)

    # ---- weight / bias preprocessing ------------------------------------
    # NOTE: transpose + pad + cast should be cached at parameter-setup time in
    # a real model; it is done inline here so the script is self-contained.
    wt = weight.T                        # (K, N): MXU-friendly, no in-kernel transpose
    if wt.shape != (Kp, Np):
        wt = jnp.pad(wt, ((0, Kp - K), (0, Np - N)))
    if wt.dtype != cdt:
        wt = wt.astype(cdt)
    bp = bias.astype(jnp.float32) * bmul
    if Np != N:
        bp = jnp.pad(bp, (0, Np - N))
    bp = bp.reshape(1, Np)

    def _pad_cast_x(arr, rows, cols):
        if arr.shape != (rows, cols):
            arr = jnp.pad(arr, ((0, rows - arr.shape[0]), (0, cols - arr.shape[1])))
        if arr.dtype != cdt:
            arr = arr.astype(cdt)
        return arr

    # ---- path selection ---------------------------------------------------
    w_vmem = 2 * Kp * Np * cbytes        # conservatively assume double-buffered
    bias_vmem = 2 * Np * 4
    use_fast = (w_vmem + bias_vmem) <= vmem_budget_bytes // 2

    if use_fast:
        # ---------------- resident-weight fast path -------------------------
        per_row = 2 * (Kp * cbytes + Np * obytes)        # x + out tiles, double-buffered
        tm_cap = max(align_m, (vmem_budget_bytes - w_vmem - bias_vmem) // per_row)
        tm_eff = _pick_tile(Mp_min, min(tm, tm_cap), align_m)
        # Expose >=2 M blocks when cheap so both v7x TensorCores get work.
        if Mp_min // max(tm_eff, 1) < 2 and Mp_min >= 2 * align_m and tm_eff > align_m:
            tm_eff = max(align_m, ((tm_eff // 2) // align_m) * align_m)
        Mp = _round_up(Mp_min, tm_eff)

        xp = _pad_cast_x(x2, Mp, Kp)
        out = pl.pallas_call(
            functools.partial(_resident_kernel, wmul=wmul),
            out_shape=jax.ShapeDtypeStruct((Mp, Np), orig_dtype),
            grid=(Mp // tm_eff,),
            in_specs=[
                pl.BlockSpec((tm_eff, Kp), lambda i: (i, 0)),   # x tile
                pl.BlockSpec((Kp, Np), lambda i: (0, 0)),       # whole weight (K, N)
                pl.BlockSpec((1, Np), lambda i: (0, 0)),        # bias row
            ],
            out_specs=pl.BlockSpec((tm_eff, Np), lambda i: (i, 0)),
            compiler_params=pltpu.CompilerParams(
                dimension_semantics=("parallel",),
            ),
        )(xp, wt, bp)
    else:
        # ---------------- general tiled path --------------------------------
        tm_eff = _pick_tile(Mp_min, tm, align_m)
        tn_eff = _pick_tile(Np, tn, 128)
        tk_eff = _pick_tile(Kp, tk, 128)
        nb_m = _round_up(Mp_min, tm_eff) // tm_eff
        nb_n = _round_up(Np, tn_eff) // tn_eff
        if nb_m * nb_n < 2:                       # keep both v7x TCs busy if possible
            if tn_eff > 128 and Np >= 256:
                tn_eff = max(128, tn_eff // 2)
            elif tm_eff > align_m and Mp_min >= 2 * align_m:
                tm_eff = max(align_m, ((tm_eff // 2) // align_m) * align_m)

        Mp = _round_up(Mp_min, tm_eff)
        Npt = _round_up(Np, tn_eff)
        Kpt = _round_up(Kp, tk_eff)
        if wt.shape != (Kpt, Npt):
            wt = jnp.pad(wt, ((0, Kpt - wt.shape[0]), (0, Npt - wt.shape[1])))
        if bp.shape[1] != Npt:
            bp = jnp.pad(bp, ((0, 0), (0, Npt - bp.shape[1])))

        xp = _pad_cast_x(x2, Mp, Kpt)
        out = pl.pallas_call(
            functools.partial(_tiled_kernel, wmul=wmul),
            out_shape=jax.ShapeDtypeStruct((Mp, Npt), orig_dtype),
            grid=(Mp // tm_eff, Npt // tn_eff, Kpt // tk_eff),
            in_specs=[
                pl.BlockSpec((tm_eff, tk_eff), lambda i, j, k: (i, k)),   # x
                pl.BlockSpec((tk_eff, tn_eff), lambda i, j, k: (k, j)),   # weight (K, N)
                pl.BlockSpec((1, tn_eff), lambda i, j, k: (0, j)),        # bias row
            ],
            out_specs=pl.BlockSpec((tm_eff, tn_eff), lambda i, j, k: (i, j)),
            scratch_shapes=[pltpu.VMEM((tm_eff, tn_eff), jnp.float32)],
            compiler_params=pltpu.CompilerParams(
                dimension_semantics=("parallel", "parallel", "arbitrary"),
            ),
        )(xp, wt, bp)

    if out.shape != (M, N):
        out = out[:M, :N]
    return out.reshape(*lead_shape, N)


# --------------------------------------------------------------------------
# Self-test
# --------------------------------------------------------------------------
if __name__ == "__main__":
    key = jax.random.PRNGKey(0)
    k_w, k_b, k_x, k_w2, k_x2 = jax.random.split(key, 5)

    # --- test 1: small, unaligned; resident-weight fast path, bf16 default ---
    batch, a, b = 2, 200, 72
    lrmul = 1.0
    weight = jax.random.normal(k_w, (b, a), jnp.float32) / lrmul   # PyTorch (out, in)
    bias = 0.1 * jax.random.normal(k_b, (b,), jnp.float32)
    x = jax.random.normal(k_x, (batch, a), jnp.float32)

    fwd = jax.jit(functools.partial(equalized_linear, lrmul=lrmul))
    y = jax.block_until_ready(fwd(x, weight, bias))

    wmul = math.sqrt(2.0) * a ** -0.5 * lrmul
    y_ref = jnp.dot(x, (weight * wmul).T, precision=lax.Precision.HIGHEST) + bias * lrmul
    assert y.shape == (batch, b)
    rel = float(jnp.linalg.norm(y - y_ref) / jnp.linalg.norm(y_ref))
    assert rel < 2e-2, f"bf16 fast-path rel err {rel}"

    # --- test 2: same shapes, f32 exact-mode fast path (tighter tolerance) ---
    fwd32 = jax.jit(functools.partial(equalized_linear, lrmul=lrmul,
                                      compute_dtype=jnp.float32))
    y32 = jax.block_until_ready(fwd32(x, weight, bias))
    rel32 = float(jnp.linalg.norm(y32 - y_ref) / jnp.linalg.norm(y_ref))
    assert rel32 < 1e-3, f"f32 fast-path rel err {rel32}"

    # --- test 3: force the general tiled path (multi-K accumulation, f32) ---
    M2, a2, b2 = 64, 512, 384
    w2 = jax.random.normal(k_w2, (b2, a2), jnp.float32)
    bias2 = jnp.zeros((b2,), jnp.float32)
    x2 = jax.random.normal(k_x2, (M2, a2), jnp.float32)
    fwd_gen = jax.jit(functools.partial(
        equalized_linear, compute_dtype=jnp.float32,
        tm=64, tn=128, tk=128, vmem_budget_bytes=1 << 20))   # tiny budget -> tiled path
    y2 = jax.block_until_ready(fwd_gen(x2, w2, bias2))

    wmul2 = math.sqrt(2.0) * a2 ** -0.5
    y2_ref = jnp.dot(x2, (w2 * wmul2).T, precision=lax.Precision.HIGHEST)
    assert y2.shape == (M2, b2)
    rel2 = float(jnp.linalg.norm(y2 - y2_ref) / jnp.linalg.norm(y2_ref))
    assert rel2 < 1e-3, f"tiled-path rel err {rel2}"

    print("KERNEL_OK")
</pallas_src>

<mosaic_0001>
module attributes {stable_mosaic.version = 11 : i64} {
  func.func @_resident_kernel(%arg0: i32, %arg1: memref<16x256xbf16, #tpu.memory_space<vmem>>, %arg2: memref<256x128xbf16, #tpu.memory_space<vmem>>, %arg3: memref<1x128xf32, #tpu.memory_space<vmem>>, %arg4: memref<16x128xf32, #tpu.memory_space<vmem>>) attributes {dimension_semantics = [#tpu.dimension_semantics<parallel>], iteration_bounds = array<i64: 1>, scalar_prefetch = 0 : i64, scratch_operands = 0 : i64, tpu.core_type = #tpu.core_type<tc>, window_params = [{transform_indices = @transform_0, window_bounds = array<i64: 16, 256>}, {pipeline_mode = #tpu.pipeline_mode<synchronous>, transform_indices = @transform_1, window_bounds = array<i64: 256, 128>}, {pipeline_mode = #tpu.pipeline_mode<synchronous>, transform_indices = @transform_2, window_bounds = array<i64: 1, 128>}, {transform_indices = @transform_3, window_bounds = array<i64: 16, 128>}]} {
    %c0 = arith.constant 0 : index
    %c0_0 = arith.constant 0 : index
    %0 = vector.load %arg1[%c0, %c0_0] : memref<16x256xbf16, #tpu.memory_space<vmem>>, vector<16x256xbf16>
    %c0_1 = arith.constant 0 : index
    %c0_2 = arith.constant 0 : index
    %1 = vector.load %arg2[%c0_1, %c0_2] : memref<256x128xbf16, #tpu.memory_space<vmem>>, vector<256x128xbf16>
    %cst = arith.constant dense<0.000000e+00> : vector<16x128xf32>
    %2 = tpu.matmul %0, %1, %cst {dimension_numbers = #tpu.dot_dimension_numbers<[1], [0], [0], [1], [0, 0, 1, 1], [], []>} : vector<16x256xbf16>, vector<256x128xbf16>, vector<16x128xf32> -> vector<16x128xf32>
    %cst_3 = arith.constant 1.000000e-01 : f32
    %3 = vector.broadcast %cst_3 : f32 to vector<16x128xf32>
    %4 = arith.mulf %2, %3 : vector<16x128xf32>
    %c0_4 = arith.constant 0 : index
    %c0_5 = arith.constant 0 : index
    %5 = vector.load %arg3[%c0_4, %c0_5] : memref<1x128xf32, #tpu.memory_space<vmem>>, vector<1x128xf32>
    %6 = vector.broadcast %5 : vector<1x128xf32> to vector<16x128xf32>
    %7 = arith.addf %4, %6 : vector<16x128xf32>
    %c0_6 = arith.constant 0 : index
    %c0_7 = arith.constant 0 : index
    %8 = vector.load %arg4[%c0_6, %c0_7] : memref<16x128xf32, #tpu.memory_space<vmem>>, vector<16x128xf32>
    tpu.vector_store %arg4[%c0_6, %c0_7], %7 {strides = array<i32>} : memref<16x128xf32, #tpu.memory_space<vmem>>, vector<16x128xf32>,
    return
  }
  func.func @transform_0(%arg0: i32) -> (i32, i32) {
    %c0_i32 = arith.constant 0 : i32
    %c0_i32_0 = arith.constant 0 : i32
    return %arg0, %c0_i32 : i32, i32
  }
  func.func @transform_1(%arg0: i32) -> (i32, i32) {
    %c0_i32 = arith.constant 0 : i32
    %c0_i32_0 = arith.constant 0 : i32
    %c0_i32_1 = arith.constant 0 : i32
    return %c0_i32, %c0_i32_0 : i32, i32
  }
  func.func @transform_2(%arg0: i32) -> (i32, i32) {
    %c0_i32 = arith.constant 0 : i32
    %c0_i32_0 = arith.constant 0 : i32
    %c0_i32_1 = arith.constant 0 : i32
    return %c0_i32, %c0_i32_0 : i32, i32
  }
  func.func @transform_3(%arg0: i32) -> (i32, i32) {
    %c0_i32 = arith.constant 0 : i32
    %c0_i32_0 = arith.constant 0 : i32
    return %arg0, %c0_i32 : i32, i32
  }
}

</mosaic_0001>

<llo_original>
// kernel: equalized_linear.1
$region0: #{equalized_linear.1}
  #allocation0 [shape = 'u32[]', space=smem, size = 0x4, offset = 0x4, fixed_abs, tag = 'smem constant byte address 0x4 - core index']
  #allocation1 [shape = 'u32[144,128]{1,0:T(1,128)}', space=vmem, size = 0x12000, scoped, tag = 'internal scratch']
  %s0 = inlined_call_operand.vmem [shape: bf16[16,256], index: 0, kind: input, shape index: {}]
  %s1 = inlined_call_operand.vmem [shape: bf16[256,128], index: 1, kind: input, shape index: {}]
  %s2 = inlined_call_operand.vmem [shape: f32[1,128], index: 2, kind: input, shape index: {}]
  %s3 = inlined_call_operand.vmem [shape: f32[16,128], index: 3, kind: output, shape index: {}]
  %s4 = sld [smem:[#allocation0]]
  $region22: #{equalized_linear.1} parent=0
    _
  %s6 = ssub.s32 1, %s4
  %s7 = scalar_select 0, %s6, %s4
  // Predicated region
  $region2: #{equalized_linear.1} parent=0 // pred_check
    _
  $region3: #{equalized_linear.1} parent=0 // pred_check_branch
    %9 = sbr.rel (0) target = $region5
  $region4: #{equalized_linear.1} parent=0 // pred_region
    _
  $region5: #{equalized_linear.1} parent=0 // pred_fallthru
    _
  // Predicated region
  $region6: #{equalized_linear.1} parent=0 // pred_check
    _
  $region7: #{equalized_linear.1} parent=0 // pred_check_branch
    %11 = sbr.rel (0) target = $region9
  $region8: #{equalized_linear.1} parent=0 // pred_region
    _
  $region9: #{equalized_linear.1} parent=0 // pred_fallthru
    _
  // Predicated region
  $region10: #{equalized_linear.1} parent=0 // pred_check
    _
  $region11: #{equalized_linear.1} parent=0 // pred_check_branch
    %13 = sbr.rel (0) target = $region13
  $region12: #{equalized_linear.1} parent=0 // pred_region
    _
  $region13: #{equalized_linear.1} parent=0 // pred_fallthru
    _
  %v15 = vld [vmem:[%s0] sm:$0xff]
  %v16 = vld [vmem:[%s0 + $0x8] sm:$0xff]
  %v17 = vld [vmem:[%s1] sm:$0xf]
  %v18 = vld [vmem:[%s1 + $0x4] sm:$0xf]
  %v19 = vld [vmem:[%s1 + $0x8] sm:$0xf]
  %v20 = vld [vmem:[%s1 + $0xc] sm:$0xf]
  %v21 = vld [vmem:[%s1 + $0x10] sm:$0xf]
  %v22 = vld [vmem:[%s1 + $0x14] sm:$0xf]
  %v23 = vld [vmem:[%s1 + $0x18] sm:$0xf]
  %v24 = vld [vmem:[%s1 + $0x1c] sm:$0xf]
  %v25 = vld [vmem:[%s1 + $0x20] sm:$0xf]
  %v26 = vld [vmem:[%s1 + $0x24] sm:$0xf]
  %v27 = vld [vmem:[%s1 + $0x28] sm:$0xf]
  %v28 = vld [vmem:[%s1 + $0x2c] sm:$0xf]
  %v29 = vld [vmem:[%s1 + $0x30] sm:$0xf]
  %v30 = vld [vmem:[%s1 + $0x34] sm:$0xf]
  %v31 = vld [vmem:[%s1 + $0x38] sm:$0xf]
  %v32 = vld [vmem:[%s1 + $0x3c] sm:$0xf]
  %v33 = vld [vmem:[%s1 + $0x40] sm:$0xf]
  %v34 = vld [vmem:[%s1 + $0x44] sm:$0xf]
  %v35 = vld [vmem:[%s1 + $0x48] sm:$0xf]
  %v36 = vld [vmem:[%s1 + $0x4c] sm:$0xf]
  %v37 = vld [vmem:[%s1 + $0x50] sm:$0xf]
  %v38 = vld [vmem:[%s1 + $0x54] sm:$0xf]
  %v39 = vld [vmem:[%s1 + $0x58] sm:$0xf]
  %v40 = vld [vmem:[%s1 + $0x5c] sm:$0xf]
  %v41 = vld [vmem:[%s1 + $0x60] sm:$0xf]
  %v42 = vld [vmem:[%s1 + $0x64] sm:$0xf]
  %v43 = vld [vmem:[%s1 + $0x68] sm:$0xf]
  %v44 = vld [vmem:[%s1 + $0x6c] sm:$0xf]
  %v45 = vld [vmem:[%s1 + $0x70] sm:$0xf]
  %v46 = vld [vmem:[%s1 + $0x74] sm:$0xf]
  %v47 = vld [vmem:[%s1 + $0x78] sm:$0xf]
  %v48 = vld [vmem:[%s1 + $0x7c] sm:$0xf]
  %v51 = vunpack.c.l.b16 %v15
  %v52 = vunpack.c.h.b16 %v15
  %v53 = vunpack.c.l.b16 %v16
  %v54 = vunpack.c.h.b16 %v16
  %v55 = vpack.c.b16 %v53, %v51
  %v56 = vpack.c.b16 %v54, %v52
  %v91 = vunpack.c.l.b16 %v17
  %v92 = vunpack.c.l.b16 %v18
  %v93 = vunpack.c.l.b16 %v19
  %v94 = vunpack.c.l.b16 %v20
  %v95 = vunpack.c.l.b16 %v21
  %v96 = vunpack.c.l.b16 %v22
  %v97 = vunpack.c.l.b16 %v23
  %v98 = vunpack.c.l.b16 %v24
  %v99 = vunpack.c.l.b16 %v25
  %v100 = vunpack.c.l.b16 %v26
  %v101 = vunpack.c.l.b16 %v27
  %v102 = vunpack.c.l.b16 %v28
  %v103 = vunpack.c.l.b16 %v29
  %v104 = vunpack.c.l.b16 %v30
  %v105 = vunpack.c.l.b16 %v31
  %v106 = vunpack.c.l.b16 %v32
  %v107 = vunpack.c.l.b16 %v33
  %v108 = vunpack.c.l.b16 %v34
  %v109 = vunpack.c.l.b16 %v35
  %v110 = vunpack.c.l.b16 %v36
  %v111 = vunpack.c.l.b16 %v37
  %v112 = vunpack.c.l.b16 %v38
  %v113 = vunpack.c.l.b16 %v39
  %v114 = vunpack.c.l.b16 %v40
  %v115 = vunpack.c.l.b16 %v41
  %v116 = vunpack.c.l.b16 %v42
  %v117 = vunpack.c.l.b16 %v43
  %v118 = vunpack.c.l.b16 %v44
  %v119 = vunpack.c.l.b16 %v45
  %v120 = vunpack.c.l.b16 %v46
  %v121 = vunpack.c.l.b16 %v47
  %v122 = vunpack.c.l.b16 %v48
  %v123 = vpack.c.b16 %v92, %v91
  %v124 = vpack.c.b16 %v94, %v93
  %v125 = vpack.c.b16 %v96, %v95
  %v126 = vpack.c.b16 %v98, %v97
  %v127 = vpack.c.b16 %v100, %v99
  %v128 = vpack.c.b16 %v102, %v101
  %v129 = vpack.c.b16 %v104, %v103
  %v130 = vpack.c.b16 %v106, %v105
  %v131 = vpack.c.b16 %v108, %v107
  %v132 = vpack.c.b16 %v110, %v109
  %v133 = vpack.c.b16 %v112, %v111
  %v134 = vpack.c.b16 %v114, %v113
  %v135 = vpack.c.b16 %v116, %v115
  %v136 = vpack.c.b16 %v118, %v117
  %v137 = vpack.c.b16 %v120, %v119
  %v138 = vpack.c.b16 %v122, %v121
  %155 = vmatprep.subr.bf16.mxu0 0
  %156 = vmatpush1.bf16.msra.mxu0 %v123
  %157 = vmatprep.subr.bf16.mxu0 0
  %158 = vmatpush1.bf16.msra.mxu0 %v124
  %159 = vmatprep.subr.bf16.mxu0 0
  %160 = vmatpush1.bf16.msra.mxu0 %v125
  %161 = vmatprep.subr.bf16.mxu0 0
  %162 = vmatpush1.bf16.msra.mxu0 %v126
  %163 = vmatprep.subr.bf16.mxu0 0
  %164 = vmatpush1.bf16.msra.mxu0 %v127
  %165 = vmatprep.subr.bf16.mxu0 0
  %166 = vmatpush1.bf16.msra.mxu0 %v128
  %167 = vmatprep.subr.bf16.mxu0 0
  %168 = vmatpush1.bf16.msra.mxu0 %v129
  %169 = vmatprep.subr.bf16.mxu0 0
  %170 = vmatpush1.bf16.msra.mxu0 %v130
  %171 = vmatprep.subr.bf16.mxu0 0
  %172 = vmatpush1.bf16.msra.mxu0 %v131
  %173 = vmatprep.subr.bf16.mxu0 0
  %174 = vmatpush1.bf16.msra.mxu0 %v132
  %175 = vmatprep.subr.bf16.mxu0 0
  %176 = vmatpush1.bf16.msra.mxu0 %v133
  %177 = vmatprep.subr.bf16.mxu0 0
  %178 = vmatpush1.bf16.msra.mxu0 %v134
  %179 = vmatprep.subr.bf16.mxu0 0
  %180 = vmatpush1.bf16.msra.mxu0 %v135
  %181 = vmatprep.subr.bf16.mxu0 0
  %182 = vmatpush1.bf16.msra.mxu0 %v136
  %183 = vmatprep.subr.bf16.mxu0 0
  %184 = vmatpush1.bf16.msra.mxu0 %v137
  %185 = vmatprep.subr.bf16.mxu0 0
  %186 = vmatpush1.bf16.msra.mxu0 %v138
  %187 = vmatprep.mubr.bf16.mxu0 %v56
  %188 = vmatmul.mubr.bf16.gmra.mrb[0].mxu0 %v55
  %v189 = vpop.f32.mrb[0].mxu0
  %v190 = vadd.f32 0.0, %v189
  %v191 = vpop.f32.mrb[0].mxu0
  %v192 = vpop.f32.mrb[0].mxu0
  %v193 = vadd.f32 0.0, %v192
  %v194 = vpop.f32.mrb[0].mxu0
  %195 = vdwg.mxu0
  %v196 = vmul.f32 %v190, 0.1
  %v197 = vmul.f32 %v193, 0.1
  %v198 = vld [vmem:[%s2] sm:$0x1]
  %v200 = vlaneseq
  %v201 = vshrl.u32 %v200, 7
  %v202 = vsub.s32 0, %v201
  %v203 = vrot.slane %v198, %v202
  %v205 = vadd.f32 %v196, %v203
  %v206 = vadd.f32 %v197, %v203
  %207 = vst [vmem:[%s3] sm:$0xff] %v205
  %208 = vst [vmem:[%s3 + $0x8] sm:$0xff] %v206
  // Predicated region
  $region14: #{equalized_linear.1} parent=0 // pred_check
    _
  $region15: #{equalized_linear.1} parent=0 // pred_check_branch
    %210 = sbr.rel (0) target = $region17
  $region16: #{equalized_linear.1} parent=0 // pred_region
    _
  $region17: #{equalized_linear.1} parent=0 // pred_fallthru
    _
  // Predicated region
  $region18: #{equalized_linear.1} parent=0 // pred_check
    _
  $region19: #{equalized_linear.1} parent=0 // pred_check_branch
    %212 = sbr.rel (0) target = $region21
  $region20: #{equalized_linear.1} parent=0 // pred_region
    _
  $region21: #{equalized_linear.1} parent=0 // pred_fallthru
    _

</llo_original>
